<compile_context>
chip_gen: v6e
topology: v6e:2x2x1
jax: 0.10.0
libtpu: 0.0.40
codegen_flags: <defaults>
</compile_context>

<pallas_src>
import functools
import math

import jax
import jax.numpy as jnp
import numpy as np
from jax.experimental import pallas as pl
from jax.experimental.pallas import tpu as pltpu

_LANE = 128
_SUBLANE = 8


def _round_up(x: int, m: int) -> int:
    return ((x + m - 1) // m) * m


def _same_padding(kernel_size: int, dilation: int = 1) -> tuple[int, int]:
    total = dilation * (kernel_size - 1)
    left = total // 2
    return left, total - left


def _gelu(y, approximate: bool):
    if approximate:
        # tanh GELU -> transcendental lands on the EUP slot (cheaper than erf's VPU
        # polynomial); semantics then differ slightly from torch's default.
        return jax.nn.gelu(y, approximate=True)
    return 0.5 * y * (1.0 + jax.lax.erf(y * (1.0 / math.sqrt(2.0))))


def conv_block_1d_kernel(w_ref, b_ref, xa_ref, xh_ref, o_ref, *,
                         kernel_size: int, dilation: int, tile_t: int,
                         fold_taps: bool, approximate_gelu: bool):
    """Grid step (b, i): one batch element, one lane-dense time tile.

    w_ref : (C_out, K*C_in') [fold] or (K, C_out, C_in') [per-tap]   (mxu dtype)
    b_ref : (C_out, 1)  f32
    xa_ref: (1, C_in', tile_t)      padded-input columns [i*tile_t, (i+1)*tile_t)
    xh_ref: (1, C_in', halo_block)  right-halo columns starting at (i+1)*tile_t
    o_ref : (1, C_out, tile_t)
    """
    xa = xa_ref[0]
    xh = xh_ref[0]
    # (C_in', tile_t + halo_block): aligned lane concat; holds every tap's window.
    x_win = jnp.concatenate([xa, xh], axis=-1)

    if fold_taps:
        w = w_ref[...]                                             # (C_out, K*C_in')
        taps = [x_win[:, k * dilation:k * dilation + tile_t] for k in range(kernel_size)]
        slab = taps[0] if kernel_size == 1 else jnp.concatenate(taps, axis=0)
        acc = jnp.dot(w, slab.astype(w.dtype), preferred_element_type=jnp.float32)
    else:
        c_out = o_ref.shape[1]
        acc = jnp.zeros((c_out, tile_t), jnp.float32)
        for k in range(kernel_size):
            w_k = w_ref[k]                                         # (C_out, C_in')
            tap = x_win[:, k * dilation:k * dilation + tile_t]
            acc = acc + jnp.dot(w_k, tap.astype(w_k.dtype),
                                preferred_element_type=jnp.float32)

    acc = acc + b_ref[...]                                         # f32 bias (lane broadcast)
    o_ref[0] = _gelu(acc, approximate_gelu).astype(o_ref.dtype)


def convolution_block_1d(x, weight, bias, *, kernel_size: int = 3, stride: int = 1,
                         padding: str = "same", dilation: int = 1, groups: int = 1,
                         tile_t: int | None = None, fold_taps: bool | None = None,
                         mxu_dtype=jnp.bfloat16, approximate_gelu: bool = False):
    """Forward of ConvolutionBlock1d with the module defaults
    (norm=Identity, dropout=Identity, 'same' Conv1d, GELU activation).

    x: (N, C_in, T)   weight: (C_out, C_in, K)   bias: (C_out,)  ->  (N, C_out, T)
    """
    if stride != 1 or groups != 1 or padding != "same":
        # TODO(synk): stride>1 / groups>1 / integer padding are not implemented here.
        raise NotImplementedError("only stride=1, groups=1, padding='same' supported")
    n, c_in, t = x.shape
    c_out = weight.shape[0]
    assert weight.shape == (c_out, c_in, kernel_size) and bias.shape == (c_out,)

    pad_l, _ = _same_padding(kernel_size, dilation)
    halo = dilation * (kernel_size - 1)
    halo_block = _round_up(max(halo, 1), _LANE)       # width of the right-halo view

    if tile_t is None:
        tile_t = min(512, _round_up(t, _LANE))        # lane-dense, VMEM-friendly default
    tile_t = _round_up(tile_t, halo_block)            # halo view must tile the time axis
    t_padded = _round_up(t, tile_t)                   # lane-dense output tiles
    num_t = t_padded // tile_t
    halo_step = tile_t // halo_block

    # Pad channels to a sublane multiple (keeps in-kernel sublane concats aligned) and
    # pad time with the 'same' left pad plus zeros on the right for the last halo view.
    c_in_p = _round_up(c_in, _SUBLANE)
    t_in = num_t * tile_t + halo_block
    # TODO(synk): this wrapper-side jnp.pad is an extra HBM pass over x; it could be
    # removed by masking the boundary taps inside the kernel.
    x_pad = jnp.pad(x, ((0, 0), (0, c_in_p - c_in), (pad_l, t_in - t - pad_l)))

    if fold_taps is None:
        # Fold K into the MXU contraction when channels are narrow (better MXU fill).
        fold_taps = kernel_size * c_in_p <= 1024

    w = jnp.pad(weight, ((0, 0), (0, c_in_p - c_in), (0, 0)))      # (C_out, C_in', K)
    if fold_taps:
        # (C_out, K*C_in'), k-major columns -> matches the in-kernel im2col slab rows.
        w_packed = jnp.transpose(w, (0, 2, 1)).reshape(c_out, kernel_size * c_in_p)
        w_spec = pl.BlockSpec((c_out, kernel_size * c_in_p), lambda b, i: (0, 0))
    else:
        # (K, C_out, C_in') -> w_ref[k] is a clean sublane/lane-dense 2-D tile.
        w_packed = jnp.transpose(w, (2, 0, 1))
        w_spec = pl.BlockSpec((kernel_size, c_out, c_in_p), lambda b, i: (0, 0, 0))
    w_packed = w_packed.astype(mxu_dtype)
    bias2d = bias.reshape(c_out, 1).astype(jnp.float32)

    # VMEM budget: double-buffered blocks + in-kernel temporaries -> explicit limit.
    in_bytes = x_pad.dtype.itemsize
    est = (2 * c_in_p * (tile_t + halo_block) * in_bytes
           + 2 * c_out * tile_t * x.dtype.itemsize
           + int(w_packed.size) * w_packed.dtype.itemsize
           + (kernel_size * c_in_p * tile_t + c_in_p * (tile_t + halo_block)
              + 2 * c_out * tile_t) * 4)
    vmem_limit = int(min(max(32 * 1024 * 1024, 4 * est), 64 * 1024 * 1024))

    kernel = functools.partial(
        conv_block_1d_kernel, kernel_size=kernel_size, dilation=dilation,
        tile_t=tile_t, fold_taps=fold_taps, approximate_gelu=approximate_gelu)

    out = pl.pallas_call(
        kernel,
        out_shape=jax.ShapeDtypeStruct((n, c_out, t_padded), x.dtype),
        grid_spec=pltpu.PrefetchScalarGridSpec(
            num_scalar_prefetch=0,
            grid=(n, num_t),
            in_specs=[
                w_spec,
                pl.BlockSpec((c_out, 1), lambda b, i: (0, 0)),
                pl.BlockSpec((1, c_in_p, tile_t), lambda b, i: (b, 0, i)),
                pl.BlockSpec((1, c_in_p, halo_block),
                             lambda b, i: (b, 0, (i + 1) * halo_step)),
            ],
            out_specs=pl.BlockSpec((1, c_out, tile_t), lambda b, i: (b, 0, i)),
        ),
        compiler_params=pltpu.CompilerParams(
            dimension_semantics=("parallel", "parallel"),
            vmem_limit_bytes=vmem_limit,
        ),
    )(w_packed, bias2d, x_pad, x_pad)
    return out[:, :, :t]


def _reference(x, weight, bias, *, kernel_size=3, dilation=1, approximate_gelu=False):
    """Plain-JAX reference: 'same' Conv1d (+dilation) + GELU."""
    pad_l, pad_r = _same_padding(kernel_size, dilation)
    y = jax.lax.conv_general_dilated(
        x, weight, window_strides=(1,), padding=[(pad_l, pad_r)],
        rhs_dilation=(dilation,), dimension_numbers=("NCH", "OIH", "NCH"),
    ) + bias.reshape(1, -1, 1)
    return _gelu(y, approximate_gelu)


if __name__ == "__main__":
    # Shapes consistent with the module: batch=2, in_channels=4, out_channels=8,
    # in_timesteps=16, kernel_size=3.
    N, C_IN, C_OUT, T, K = 2, 4, 8, 16, 3

    key = jax.random.PRNGKey(0)
    kx, kw, kb = jax.random.split(key, 3)
    x = jax.random.normal(kx, (N, C_IN, T), dtype=jnp.float32)
    fan_in = C_IN * K
    bound = 1.0 / math.sqrt(fan_in)
    weight = jax.random.uniform(kw, (C_OUT, C_IN, K), jnp.float32, -bound, bound)
    bias = jax.random.uniform(kb, (C_OUT,), jnp.float32, -bound, bound)

    ref = _reference(x, weight, bias, kernel_size=K)

    # 1) Exact-f32 MXU path, folded taps (narrow-channel default): tight match.
    out = jax.block_until_ready(
        convolution_block_1d(x, weight, bias, kernel_size=K, mxu_dtype=jnp.float32))
    np.testing.assert_allclose(np.asarray(out), np.asarray(ref), rtol=1e-5, atol=1e-5)

    # 2) Per-tap path with the (K, C_out, C_in) repacked weight (wide-channel variant).
    out_tap = jax.block_until_ready(
        convolution_block_1d(x, weight, bias, kernel_size=K,
                             fold_taps=False, mxu_dtype=jnp.float32))
    np.testing.assert_allclose(np.asarray(out_tap), np.asarray(ref), rtol=1e-5, atol=1e-5)

    # 3) Default bf16 MXU operands (f32 accumulation / bias / GELU): loose tolerance.
    out_bf16 = jax.block_until_ready(
        convolution_block_1d(x, weight, bias, kernel_size=K))
    np.testing.assert_allclose(np.asarray(out_bf16), np.asarray(ref), rtol=3e-2, atol=3e-2)

    # 4) dilation > 1 is now honoured (was silently ignored before).
    ref_d2 = _reference(x, weight, bias, kernel_size=K, dilation=2)
    out_d2 = jax.block_until_ready(
        convolution_block_1d(x, weight, bias, kernel_size=K, dilation=2,
                             mxu_dtype=jnp.float32))
    np.testing.assert_allclose(np.asarray(out_d2), np.asarray(ref_d2), rtol=1e-5, atol=1e-5)

    print("KERNEL_OK")
</pallas_src>

<mosaic_0001>
module attributes {stable_mosaic.version = 11 : i64} {
  func.func @conv_block_1d_kernel(%arg0: i32, %arg1: i32, %arg2: memref<8x24xf32, #tpu.memory_space<vmem>>, %arg3: memref<8x1xf32, #tpu.memory_space<vmem>>, %arg4: memref<1x8x128xf32, #tpu.memory_space<vmem>>, %arg5: memref<1x8x128xf32, #tpu.memory_space<vmem>>, %arg6: memref<1x8x128xf32, #tpu.memory_space<vmem>>) attributes {dimension_semantics = [#tpu.dimension_semantics<parallel>, #tpu.dimension_semantics<parallel>], iteration_bounds = array<i64: 2, 1>, scalar_prefetch = 0 : i64, scratch_operands = 0 : i64, tpu.core_type = #tpu.core_type<tc>, window_params = [{pipeline_mode = #tpu.pipeline_mode<synchronous>, transform_indices = @transform_0, window_bounds = array<i64: 8, 24>}, {pipeline_mode = #tpu.pipeline_mode<synchronous>, transform_indices = @transform_1, window_bounds = array<i64: 8, 1>}, {transform_indices = @transform_2, window_bounds = array<i64: 1, 8, 128>}, {transform_indices = @transform_3, window_bounds = array<i64: 1, 8, 128>}, {transform_indices = @transform_4, window_bounds = array<i64: 1, 8, 128>}]} {
    %c0 = arith.constant 0 : index
    %c0_0 = arith.constant 0 : index
    %c0_1 = arith.constant 0 : index
    %0 = vector.load %arg4[%c0, %c0_0, %c0_1] : memref<1x8x128xf32, #tpu.memory_space<vmem>>, vector<1x8x128xf32>
    %1 = vector.shape_cast %0 : vector<1x8x128xf32> to vector<8x128xf32>
    %c0_2 = arith.constant 0 : index
    %c0_3 = arith.constant 0 : index
    %c0_4 = arith.constant 0 : index
    %2 = vector.load %arg5[%c0_2, %c0_3, %c0_4] : memref<1x8x128xf32, #tpu.memory_space<vmem>>, vector<1x8x128xf32>
    %3 = vector.shape_cast %2 : vector<1x8x128xf32> to vector<8x128xf32>
    %4 = tpu.concatenate %1, %3 in 1 : vector<8x128xf32>, vector<8x128xf32> -> vector<8x256xf32>
    %c0_5 = arith.constant 0 : index
    %c0_6 = arith.constant 0 : index
    %5 = vector.load %arg2[%c0_5, %c0_6] : memref<8x24xf32, #tpu.memory_space<vmem>>, vector<8x24xf32>
    %6 = vector.extract_strided_slice %4 {offsets = [0, 0], sizes = [8, 128], strides = [1, 1]} : vector<8x256xf32> to vector<8x128xf32>
    %7 = vector.extract_strided_slice %4 {offsets = [0, 1], sizes = [8, 128], strides = [1, 1]} : vector<8x256xf32> to vector<8x128xf32>
    %8 = vector.extract_strided_slice %4 {offsets = [0, 2], sizes = [8, 128], strides = [1, 1]} : vector<8x256xf32> to vector<8x128xf32>
    %9 = tpu.concatenate %6, %7, %8 in 0 : vector<8x128xf32>, vector<8x128xf32>, vector<8x128xf32> -> vector<24x128xf32>
    %cst = arith.constant dense<0.000000e+00> : vector<8x128xf32>
    %10 = tpu.matmul %5, %9, %cst {dimension_numbers = #tpu.dot_dimension_numbers<[1], [0], [0], [1], [0, 0, 1, 1], [], []>} : vector<8x24xf32>, vector<24x128xf32>, vector<8x128xf32> -> vector<8x128xf32>
    %c0_7 = arith.constant 0 : index
    %c0_8 = arith.constant 0 : index
    %11 = vector.load %arg3[%c0_7, %c0_8] : memref<8x1xf32, #tpu.memory_space<vmem>>, vector<8x1xf32>
    %12 = vector.broadcast %11 : vector<8x1xf32> to vector<8x128xf32>
    %13 = arith.addf %10, %12 : vector<8x128xf32>
    %cst_9 = arith.constant 5.000000e-01 : f32
    %14 = vector.broadcast %cst_9 : f32 to vector<8x128xf32>
    %15 = arith.mulf %14, %13 : vector<8x128xf32>
    %cst_10 = arith.constant 0.707106769 : f32
    %16 = vector.broadcast %cst_10 : f32 to vector<8x128xf32>
    %17 = arith.mulf %13, %16 : vector<8x128xf32>
    %18 = math.erf %17 : vector<8x128xf32>
    %cst_11 = arith.constant 1.000000e+00 : f32
    %19 = vector.broadcast %cst_11 : f32 to vector<8x128xf32>
    %20 = arith.addf %19, %18 : vector<8x128xf32>
    %21 = arith.mulf %15, %20 : vector<8x128xf32>
    %c0_12 = arith.constant 0 : index
    %c0_13 = arith.constant 0 : index
    %c0_14 = arith.constant 0 : index
    %22 = vector.load %arg6[%c0_12, %c0_13, %c0_14] : memref<1x8x128xf32, #tpu.memory_space<vmem>>, vector<1x8x128xf32>
    %23 = vector.shape_cast %22 : vector<1x8x128xf32> to vector<8x128xf32>
    %24 = vector.shape_cast %21 : vector<8x128xf32> to vector<1x8x128xf32>
    tpu.vector_store %arg6[%c0_12, %c0_13, %c0_14], %24 {strides = array<i32>} : memref<1x8x128xf32, #tpu.memory_space<vmem>>, vector<1x8x128xf32>,
    return
  }
  func.func @transform_0(%arg0: i32, %arg1: i32) -> (i32, i32) {
    %c0_i32 = arith.constant 0 : i32
    %c0_i32_0 = arith.constant 0 : i32
    %c0_i32_1 = arith.constant 0 : i32
    return %c0_i32, %c0_i32_0 : i32, i32
  }
  func.func @transform_1(%arg0: i32, %arg1: i32) -> (i32, i32) {
    %c0_i32 = arith.constant 0 : i32
    %c0_i32_0 = arith.constant 0 : i32
    %c0_i32_1 = arith.constant 0 : i32
    return %c0_i32, %c0_i32_0 : i32, i32
  }
  func.func @transform_2(%arg0: i32, %arg1: i32) -> (i32, i32, i32) {
    %c0_i32 = arith.constant 0 : i32
    %c0_i32_0 = arith.constant 0 : i32
    return %arg0, %c0_i32, %arg1 : i32, i32, i32
  }
  func.func @transform_3(%arg0: i32, %arg1: i32) -> (i32, i32, i32) {
    %c1_i32 = arith.constant 1 : i32
    %0 = arith.addi %arg1, %c1_i32 : i32
    %c1_i32_0 = arith.constant 1 : i32
    %1 = arith.muli %0, %c1_i32_0 : i32
    %c0_i32 = arith.constant 0 : i32
    %c0_i32_1 = arith.constant 0 : i32
    return %arg0, %c0_i32, %1 : i32, i32, i32
  }
  func.func @transform_4(%arg0: i32, %arg1: i32) -> (i32, i32, i32) {
    %c0_i32 = arith.constant 0 : i32
    %c0_i32_0 = arith.constant 0 : i32
    return %arg0, %c0_i32, %arg1 : i32, i32, i32
  }
}

</mosaic_0001>

<llo_original>
// kernel: tpu_custom_call.1
$region0: #{tpu_custom_call.1}
  #allocation0 [shape = 'u32[]', space=smem, size = 0x4, offset = 0x4, fixed_abs, tag = 'smem constant byte address 0x4 - core index']
  #allocation1 [shape = 'u32[144,128]{1,0:T(1,128)}', space=vmem, size = 0x12000, scoped, tag = 'internal scratch']
  %s0 = inlined_call_operand.vmem [shape: f32[8,24], index: 0, kind: input, shape index: {}]
  %s1 = inlined_call_operand.vmem [shape: f32[8,1], index: 1, kind: input, shape index: {}]
  %s2 = inlined_call_operand.hbm [shape: f32[2,8,256], index: 2, kind: input, shape index: {}]
  %s3 = inlined_call_operand.hbm [shape: f32[2,8,256], index: 3, kind: input, shape index: {}]
  %s4 = inlined_call_operand.hbm [shape: f32[2,8,128], index: 4, kind: output, shape index: {}]
  %s5 = sld [smem:[#allocation0]]
  $region57: #{tpu_custom_call.1} parent=0
    _
  %s7 = ssub.s32 1, %s5
  %s8 = scalar_select 0, %s7, %s5
  $region1: #{tpu_custom_call.1} parent=0
    #allocation2 [shape = 'u8[8192]{0}', space=vmem, size = 0x2000, scoped, tag = 'input window, operand 2']
    #allocation3 [shape = 's32[2]{0}', space=sflag, size = 0x8, scoped, tag = 'scoped memory for tpu_custom_call.1']
    #allocation4 [shape = 's32[2]{0}', space=sflag, size = 0x8, scoped, tag = 'scoped memory for tpu_custom_call.1']
    #allocation5 [shape = 'u8[8192]{0}', space=vmem, size = 0x2000, scoped, tag = 'input window, operand 3']
    #allocation6 [shape = 's32[2]{0}', space=sflag, size = 0x8, scoped, tag = 'scoped memory for tpu_custom_call.1']
    #allocation7 [shape = 'u8[8192]{0}', space=vmem, size = 0x2000, scoped, tag = 'output window, operand 0']
    %9 = vsyncpa [#allocation3], 0
    %s10 = scalar_lea.sflag [#allocation3], 1
    %11 = vsyncpa %s10, 0
    %12 = vsyncpa [#allocation6], 0
    %s13 = scalar_lea.sflag [#allocation6], 1
    %14 = vsyncpa %s13, 0
    %15 = vsyncpa [#allocation4], 0
    %s16 = scalar_lea.sflag [#allocation4], 1
    %17 = vsyncpa %s16, 0
    loop: start=0, step=1, limit=4
    $region2: #{tpu_custom_call.1} parent=1 // loop_pre_header
      _
    $region3: #{tpu_custom_call.1} parent=1 // loop_header
      %s19 = sphi 0, %s23
      %p20 = scmp.ge.s32.totalorder %s19, 4
      %s26 = sphi 0, %s38
      %s27 = sphi 0, %s34
      %s28 = sphi 0, %s26
      %s29 = sphi 0, %s27
      %s30 = sphi 0, %s28
      %s31 = sphi 0, %s29
      %s39 = sphi 0, %s39
      %s41 = sphi 0, %s39
      %s42 = sphi 0, %s41
      %s56 = sphi 0, %s42
      %s60 = sphi 0, %s60
      %s62 = sphi 0, %s60
      %s63 = sphi 0, %s62
      %s77 = sphi 0, %s63
      %s85 = sphi 0, %s87
      %s88 = sphi 0, %s85
      %s89 = sphi 0, %s88
      %s105 = sphi 0, %s89
      %s115 = sphi 0, %s117
      %s118 = sphi 0, %s115
      %s119 = sphi 0, %s118
      %s135 = sphi 0, %s119
      %s143 = sphi 0, %s145
      %s146 = sphi 0, %s143
      %s147 = sphi 0, %s146
      %s163 = sphi 0, %s147
    $region4: #{tpu_custom_call.1} parent=1 // loop_header_branch
      %22 = sbr.rel (%p20) target = $region8
    $region5: #{tpu_custom_call.1} parent=1 // loop_body
      %s24 = ssub.s32 %s19, 1
      %s25 = ssub.s32 %s19, 2
      %s32 = sadd.s32 1, %s27
      %p33 = scmp.ge.s32.totalorder %s32, 1
      %s34 = scalar_select %p33, 0, %s32
      %s35 = sadd.s32 1, %s26
      %s36 = scalar_select %p33, %s35, %s26
      %p37 = scmp.ge.s32.totalorder %s36, 2
      %s38 = scalar_select %p37, 0, %s36
      %s40 = sadd.s32 %s39, 1
      %p43 = scmp.eq.s32.totalorder %s19, 1
      %p44 = scmp.ne.s32.totalorder %s39, %s41
      %p45 = scmp.eq.s32.totalorder %s19, 0
      %p46 = por %p44, %p45
      %p47 = scmp.ne.s32.totalorder %s39, %s41
      %p48 = scmp.eq.s32.totalorder %s24, 1
      %p49 = por %p47, %p48
      %p50 = scmp.ne.s32.totalorder %s41, %s42
      %p51 = scmp.eq.s32.totalorder %s24, 0
      %p52 = por %p50, %p51
      %p53 = scmp.ne.s32.totalorder %s41, %s42
      %p54 = scmp.eq.s32.totalorder %s25, 1
      %p55 = por %p53, %p54
      %p57 = scmp.ne.s32.totalorder %s42, %s56
      %p58 = scmp.eq.s32.totalorder %s25, 0
      %p59 = por %p57, %p58
      %s61 = sadd.s32 %s60, 1
      %p64 = scmp.eq.s32.totalorder %s19, 1
      %p65 = scmp.ne.s32.totalorder %s60, %s62
      %p66 = scmp.eq.s32.totalorder %s19, 0
      %p67 = por %p65, %p66
      %p68 = scmp.ne.s32.totalorder %s60, %s62
      %p69 = scmp.eq.s32.totalorder %s24, 1
      %p70 = por %p68, %p69
      %p71 = scmp.ne.s32.totalorder %s62, %s63
      %p72 = scmp.eq.s32.totalorder %s24, 0
      %p73 = por %p71, %p72
      %p74 = scmp.ne.s32.totalorder %s62, %s63
      %p75 = scmp.eq.s32.totalorder %s25, 1
      %p76 = por %p74, %p75
      %p78 = scmp.ne.s32.totalorder %s63, %s77
      %p79 = scmp.eq.s32.totalorder %s25, 0
      %p80 = por %p78, %p79
      %s81 = ssub.s32 %s26, %s38
      %s82 = ssub.s32 %s27, %s34
      %s83 = sor.u32 %s81, %s82
      %p84 = scmp.eq.s32.totalorder %s83, 0
      %s86 = sadd.s32 %s85, 1
      %s87 = scalar_select %p84, %s85, %s86
      %p90 = pneg %p84
      %p91 = scmp.eq.s32.totalorder %s19, 1
      %p92 = por %p90, %p91
      %p93 = scmp.ne.s32.totalorder %s85, %s88
      %p94 = scmp.eq.s32.totalorder %s19, 0
      %p95 = por %p93, %p94
      %p96 = scmp.ne.s32.totalorder %s85, %s88
      %p97 = scmp.eq.s32.totalorder %s24, 1
      %p98 = por %p96, %p97
      %p99 = scmp.ne.s32.totalorder %s88, %s89
      %p100 = scmp.eq.s32.totalorder %s24, 0
      %p101 = por %p99, %p100
      %p102 = scmp.ne.s32.totalorder %s88, %s89
      %p103 = scmp.eq.s32.totalorder %s25, 1
      %p104 = por %p102, %p103
      %p106 = scmp.ne.s32.totalorder %s89, %s105
      %p107 = scmp.eq.s32.totalorder %s25, 0
      %p108 = por %p106, %p107
      %s109 = sadd.s32 %s27, 1
      %s110 = sadd.s32 %s34, 1
      %s111 = ssub.s32 %s26, %s38
      %s112 = ssub.s32 %s109, %s110
      %s113 = sor.u32 %s111, %s112
      %p114 = scmp.eq.s32.totalorder %s113, 0
      %s116 = sadd.s32 %s115, 1
      %s117 = scalar_select %p114, %s115, %s116
      %p120 = pneg %p114
      %p121 = scmp.eq.s32.totalorder %s19, 1
      %p122 = por %p120, %p121
      %p123 = scmp.ne.s32.totalorder %s115, %s118
      %p124 = scmp.eq.s32.totalorder %s19, 0
      %p125 = por %p123, %p124
      %p126 = scmp.ne.s32.totalorder %s115, %s118
      %p127 = scmp.eq.s32.totalorder %s24, 1
      %p128 = por %p126, %p127
      %p129 = scmp.ne.s32.totalorder %s118, %s119
      %p130 = scmp.eq.s32.totalorder %s24, 0
      %p131 = por %p129, %p130
      %p132 = scmp.ne.s32.totalorder %s118, %s119
      %p133 = scmp.eq.s32.totalorder %s25, 1
      %p134 = por %p132, %p133
      %p136 = scmp.ne.s32.totalorder %s119, %s135
      %p137 = scmp.eq.s32.totalorder %s25, 0
      %p138 = por %p136, %p137
      %s139 = ssub.s32 %s26, %s38
      %s140 = ssub.s32 %s27, %s34
      %s141 = sor.u32 %s139, %s140
      %p142 = scmp.eq.s32.totalorder %s141, 0
      %s144 = sadd.s32 %s143, 1
      %s145 = scalar_select %p142, %s143, %s144
      %p148 = pneg %p142
      %p149 = scmp.eq.s32.totalorder %s19, 1
      %p150 = por %p148, %p149
      %p151 = scmp.ne.s32.totalorder %s143, %s146
      %p152 = scmp.eq.s32.totalorder %s19, 0
      %p153 = por %p151, %p152
      %p154 = scmp.ne.s32.totalorder %s143, %s146
      %p155 = scmp.eq.s32.totalorder %s24, 1
      %p156 = por %p154, %p155
      %p157 = scmp.ne.s32.totalorder %s146, %s147
      %p158 = scmp.eq.s32.totalorder %s24, 0
      %p159 = por %p157, %p158
      %p160 = scmp.ne.s32.totalorder %s146, %s147
      %p161 = scmp.eq.s32.totalorder %s25, 1
      %p162 = por %p160, %p161
      %p164 = scmp.ne.s32.totalorder %s147, %s163
      %p165 = scmp.eq.s32.totalorder %s25, 0
      %p166 = por %p164, %p165
      %p167 = scmp.le.s32.totalorder 1, %s19
      %p168 = scmp.lt.s32.totalorder %s19, 3
      %p169 = pnand %p167, %p168
      %p170 = pneg %p169
      // Predicated region
      $region9: #{tpu_custom_call.1} parent=5 // pred_check
        _
      $region10: #{tpu_custom_call.1} parent=5 // pred_check_branch
        %172 = sbr.rel (%p169) target = $region12
      $region11: #{tpu_custom_call.1} parent=5 // pred_region
        %s173 = ssub.s32 %s19, 1
        // Predicated region
        $region13: #{tpu_custom_call.1} parent=11 // pred_check
          %p174 = pneg %p52
        $region14: #{tpu_custom_call.1} parent=11 // pred_check_branch
          %176 = sbr.rel (%p174) target = $region16
        $region15: #{tpu_custom_call.1} parent=11 // pred_region
          _
        $region16: #{tpu_custom_call.1} parent=11 // pred_fallthru
          _
        // Predicated region
        $region17: #{tpu_custom_call.1} parent=11 // pred_check
          %p177 = pneg %p73
        $region18: #{tpu_custom_call.1} parent=11 // pred_check_branch
          %179 = sbr.rel (%p177) target = $region20
        $region19: #{tpu_custom_call.1} parent=11 // pred_region
          _
        $region20: #{tpu_custom_call.1} parent=11 // pred_fallthru
          _
      $region12: #{tpu_custom_call.1} parent=5 // pred_fallthru
        _
      %p180 = scmp.lt.s32.totalorder %s19, 2
      // Predicated region
      $region21: #{tpu_custom_call.1} parent=5 // pred_check
        %p181 = pneg %p180
      $region22: #{tpu_custom_call.1} parent=5 // pred_check_branch
        %183 = sbr.rel (%p181) target = $region24
      $region23: #{tpu_custom_call.1} parent=5 // pred_region
        // Predicated region
        $region25: #{tpu_custom_call.1} parent=23 // pred_check
          %p184 = pneg %p95
        $region26: #{tpu_custom_call.1} parent=23 // pred_check_branch
          %186 = sbr.rel (%p184) target = $region28
        $region27: #{tpu_custom_call.1} parent=23 // pred_region
          %s187 = sand.u32 %s85, 1
          %s188 = scalar_lea.sflag [#allocation3], %s187
          %s189 = sand.u32 %s85, 1
          %s190 = smul.addr %s189, 8
          %s191 = scalar_lea.vmem [#allocation2], %s190
          %s193 = ssub.s32 128, 128
          %194 = vsyncadd %s188, %s193
          %s195 = smul.addr %s26, 2
          %s196 = sadd.s32 %s27, %s195
          %s197 = smul.addr %s196, 128
          %s198 = scalar_lea.hbm %s2, %s197
          %s200 = sshll.u32 %s191, 4
          %s201 = int_to_ptr.vmem [resolvable:$true] %s200
          %203 = dma.hbm_to_vmem [thread:$0]  %s198, 128, %s201, %s188
        $region28: #{tpu_custom_call.1} parent=23 // pred_fallthru
          _
        // Predicated region
        $region29: #{tpu_custom_call.1} parent=23 // pred_check
          %p204 = pneg %p125
        $region30: #{tpu_custom_call.1} parent=23 // pred_check_branch
          %206 = sbr.rel (%p204) target = $region32
        $region31: #{tpu_custom_call.1} parent=23 // pred_region
          %s207 = sand.u32 %s115, 1
          %s208 = scalar_lea.sflag [#allocation6], %s207
          %s209 = sand.u32 %s115, 1
          %s210 = smul.addr %s209, 8
          %s211 = scalar_lea.vmem [#allocation5], %s210
          %s212 = sadd.s32 %s27, 1
          %s214 = ssub.s32 128, 128
          %215 = vsyncadd %s208, %s214
          %s216 = smul.addr %s26, 2
          %s217 = sadd.s32 %s212, %s216
          %s218 = smul.addr %s217, 128
          %s219 = scalar_lea.hbm %s3, %s218
          %s221 = sshll.u32 %s211, 4
          %s222 = int_to_ptr.vmem [resolvable:$true] %s221
          %224 = dma.hbm_to_vmem [thread:$0]  %s219, 128, %s222, %s208
        $region32: #{tpu_custom_call.1} parent=23 // pred_fallthru
          _
      $region24: #{tpu_custom_call.1} parent=5 // pred_fallthru
        _
      %p225 = scmp.le.s32.totalorder 1, %s19
      %p226 = scmp.lt.s32.totalorder %s19, 3
      %p227 = pnand %p225, %p226
      %p228 = pneg %p227
      // Predicated region
      $region33: #{tpu_custom_call.1} parent=5 // pred_check
        _
      $region34: #{tpu_custom_call.1} parent=5 // pred_check_branch
        %230 = sbr.rel (%p227) target = $region36
      $region35: #{tpu_custom_call.1} parent=5 // pred_region
        %s231 = ssub.s32 %s19, 1
        %s232 = sand.u32 %s88, 1
        %s233 = scalar_lea.sflag [#allocation3], %s232
        %s234 = sand.u32 %s88, 1
        %s235 = smul.addr %s234, 8
        %s236 = scalar_lea.vmem [#allocation2], %s235
        // Predicated region
        $region37: #{tpu_custom_call.1} parent=35 // pred_check
          %p237 = pneg %p101
        $region38: #{tpu_custom_call.1} parent=35 // pred_check_branch
          %239 = sbr.rel (%p237) target = $region40
        $region39: #{tpu_custom_call.1} parent=35 // pred_region
          %240 = dma.done %s233, 128
        $region40: #{tpu_custom_call.1} parent=35 // pred_fallthru
          _
        %s241 = sand.u32 %s118, 1
        %s242 = scalar_lea.sflag [#allocation6], %s241
        %s243 = sand.u32 %s118, 1
        %s244 = smul.addr %s243, 8
        %s245 = scalar_lea.vmem [#allocation5], %s244
        // Predicated region
        $region41: #{tpu_custom_call.1} parent=35 // pred_check
          %p246 = pneg %p131
        $region42: #{tpu_custom_call.1} parent=35 // pred_check_branch
          %248 = sbr.rel (%p246) target = $region44
        $region43: #{tpu_custom_call.1} parent=35 // pred_region
          %249 = dma.done %s242, 128
        $region44: #{tpu_custom_call.1} parent=35 // pred_fallthru
          _
        %p250 = pneg %p52
        %p251 = pneg %p49
        %p252 = pneg %p73
        %p253 = pneg %p70
        %s254 = sand.u32 %s88, 1
        %s255 = scalar_lea.sflag [#allocation3], %s254
        %s256 = sand.u32 %s88, 1
        %s257 = smul.addr %s256, 8
        %s258 = scalar_lea.vmem [#allocation2], %s257
        %p259 = pneg %p101
        %p260 = pneg %p98
        %s261 = sand.u32 %s118, 1
        %s262 = scalar_lea.sflag [#allocation6], %s261
        %s263 = sand.u32 %s118, 1
        %s264 = smul.addr %s263, 8
        %s265 = scalar_lea.vmem [#allocation5], %s264
        %p266 = pneg %p131
        %p267 = pneg %p128
        %p268 = pneg %p159
        %p269 = pneg %p156
        %s270 = sand.u32 %s146, 1
        %s271 = scalar_lea.sflag [#allocation4], %s270
        %s272 = sand.u32 %s146, 1
        %s273 = smul.addr %s272, 8
        %s274 = scalar_lea.vmem [#allocation7], %s273
        %s275 = sadd.s32 %s29, 1
        %v276 = vld [vmem:[%s236] sm:$0xff]
        %v277 = vld [vmem:[%s245] sm:$0xff]
        %v278 = vld [vmem:[%s0] sm:$0xff]
        %281 = vrot.lane.b32.xlu0 %v276, 127
        %v282 = vpop.permute.xlu0 %281
        %283 = vrot.lane.b32.xlu0 %v277, 127
        %v284 = vpop.permute.xlu0 %283
        %vm285 = vcmask 1039360
        %v286 = vsel %vm285, %v282, %v284
        %288 = vrot.lane.b32.xlu0 %v276, 126
        %v289 = vpop.permute.xlu0 %288
        %290 = vrot.lane.b32.xlu0 %v277, 126
        %v291 = vpop.permute.xlu0 %290
        %vm292 = vcmask 1031168
        %v293 = vsel %vm292, %v289, %v291
        %v295 = vld [vmem:[%s1] sm:$0xff]
        %297 = vset.pattern.permute.xlu0 0
        %298 = vperm.xlu0 %297, %v295
        %v299 = vpop.permute.xlu0 %298
        %vm301 = vcmask 195584
        %v303 = vsel %vm301, %v278, 0
        %305 = vmatprep.subr.mxu0 0.0
        %306 = vmatpush1.msra.mxu0 0.0
        %307 = vmatprep.subr.mxu0 0.0
        %308 = vmatpush1.msra.mxu0 0.0
        %309 = vmatprep.subr.mxu0 0.0
        %310 = vmatpush1.msra.mxu0 0.0
        %311 = vmatprep.subr.mxu0 0.0
        %312 = vmatpush1.msra.mxu0 0.0
        %313 = vmatprep.subr.mxu0 0.0
        %314 = vmatpush1.msra.mxu0 0.0
        %315 = vmatprep.subr.mxu0 0.0
        %316 = vmatpush1.msra.mxu0 0.0
        %317 = vmatprep.subr.mxu0 0.0
        %318 = vmatpush1.msra.mxu0 0.0
        %319 = vmatprep.subr.mxu0 0.0
        %320 = vmatpush1.msra.mxu0 0.0
        %321 = vmatprep.subr.mxu0 0.0
        %322 = vmatpush1.msra.mxu0 0.0
        %323 = vmatprep.subr.mxu0 0.0
        %324 = vmatpush1.msra.mxu0 0.0
        %325 = vmatprep.subr.mxu0 0.0
        %326 = vmatpush1.msra.mxu0 0.0
        %327 = vmatprep.subr.mxu0 0.0
        %328 = vmatpush1.msra.mxu0 0.0
        %329 = vmatprep.subr.mxu0 0.0
        %330 = vmatpush1.msra.mxu0 0.0
        %331 = vmatprep.subr.mxu0 0.0
        %332 = vmatpush1.msra.mxu0 %v293
        %333 = vmatprep.subr.mxu0 0.0
        %334 = vmatpush1.msra.mxu0 %v286
        %335 = vmatprep.subr.mxu0 0.0
        %336 = vmatpush1.msra.mxu0 %v276
        %337 = vmatprep.subr.mxu0 0.0
        %338 = vmatpush2.msra.mxu0 0.0
        %339 = vmatprep.subr.mxu0 0.0
        %340 = vmatpush2.msra.mxu0 0.0
        %341 = vmatprep.subr.mxu0 0.0
        %342 = vmatpush2.msra.mxu0 0.0
        %343 = vmatprep.subr.mxu0 0.0
        %344 = vmatpush2.msra.mxu0 0.0
        %345 = vmatprep.subr.mxu0 0.0
        %346 = vmatpush2.msra.mxu0 0.0
        %347 = vmatprep.subr.mxu0 0.0
        %348 = vmatpush2.msra.mxu0 0.0
        %349 = vmatprep.subr.mxu0 0.0
        %350 = vmatpush2.msra.mxu0 0.0
        %351 = vmatprep.subr.mxu0 0.0
        %352 = vmatpush2.msra.mxu0 0.0
        %353 = vmatprep.subr.mxu0 0.0
        %354 = vmatpush2.msra.mxu0 0.0
        %355 = vmatprep.subr.mxu0 0.0
        %356 = vmatpush2.msra.mxu0 0.0
        %357 = vmatprep.subr.mxu0 0.0
        %358 = vmatpush2.msra.mxu0 0.0
        %359 = vmatprep.subr.mxu0 0.0
        %360 = vmatpush2.msra.mxu0 0.0
        %361 = vmatprep.subr.mxu0 0.0
        %362 = vmatpush2.msra.mxu0 0.0
        %363 = vmatprep.subr.mxu0 0.0
        %364 = vmatpush2.msra.mxu0 0.0
        %365 = vmatprep.subr.mxu0 0.0
        %366 = vmatpush2.msra.mxu0 0.0
        %367 = vmatprep.subr.mxu0 0.0
        %368 = vmatpush2.msra.mxu0 0.0
        %369 = vmatprep.mubr.f32.mxu0 0.0
        %370 = vmatmul.mubr.f32.gmra.mxu0 %v303
        %v371 = vpop.f32.mrf.mxu0
        %v372 = vadd.f32 %v299, %v371
        %v373 = vpop.f32.mrf.mxu0
        %374 = vdwg.mxu0
        %v375 = vmul.f32 %v372, 0.5
        %v376 = vmul.f32 %v372, 0.70710677
        %v377 = verf.f32.pop %v376
        %v378 = vadd.f32 %v377, 1.0
        %v379 = vmul.f32 %v375, %v378
        %380 = vst [vmem:[%s274] sm:$0xff] %v379
        %s381 = sand.u32 %s146, 1
        %s382 = scalar_lea.sflag [#allocation4], %s381
        %s383 = sand.u32 %s146, 1
        %s384 = smul.addr %s383, 8
        %s385 = scalar_lea.vmem [#allocation7], %s384
        // Predicated region
        $region45: #{tpu_custom_call.1} parent=35 // pred_check
          %p386 = pneg %p156
        $region46: #{tpu_custom_call.1} parent=35 // pred_check_branch
          %388 = sbr.rel (%p386) target = $region48
        $region47: #{tpu_custom_call.1} parent=35 // pred_region
          %s390 = ssub.s32 128, 128
          %391 = vsyncadd %s382, %s390
          %s392 = sadd.s32 %s29, %s28
          %s393 = smul.addr %s392, 128
          %s394 = scalar_lea.hbm %s4, %s393
          %s396 = sshll.u32 %s385, 4
          %s397 = int_to_ptr.vmem [resolvable:$true] %s396
          %399 = dma.vmem_to_hbm [thread:$0]  %s397, 128, %s394, %s382
        $region48: #{tpu_custom_call.1} parent=35 // pred_fallthru
          _
      $region36: #{tpu_custom_call.1} parent=5 // pred_fallthru
        _
      %p400 = scmp.le.s32.totalorder 2, %s19
      // Predicated region
      $region49: #{tpu_custom_call.1} parent=5 // pred_check
        %p401 = pneg %p400
      $region50: #{tpu_custom_call.1} parent=5 // pred_check_branch
        %403 = sbr.rel (%p401) target = $region52
      $region51: #{tpu_custom_call.1} parent=5 // pred_region
        %s404 = ssub.s32 %s19, 2
        // Predicated region
        $region53: #{tpu_custom_call.1} parent=51 // pred_check
          %p405 = pneg %p162
        $region54: #{tpu_custom_call.1} parent=51 // pred_check_branch
          %407 = sbr.rel (%p405) target = $region56
        $region55: #{tpu_custom_call.1} parent=51 // pred_region
          %s408 = sand.u32 %s147, 1
          %s409 = scalar_lea.sflag [#allocation4], %s408
          %s410 = sand.u32 %s147, 1
          %s411 = smul.addr %s410, 8
          %s412 = scalar_lea.vmem [#allocation7], %s411
          %413 = dma.done %s409, 128
        $region56: #{tpu_custom_call.1} parent=51 // pred_fallthru
          _
      $region52: #{tpu_custom_call.1} parent=5 // pred_fallthru
        _
    $region6: #{tpu_custom_call.1} parent=1 // loop_footer
      %s23 = sadd.s32 1, %s19
    $region7: #{tpu_custom_call.1} parent=1 // loop_footer_branch
      %18 = sbr.rel target = $region3
    $region8: #{tpu_custom_call.1} parent=1 // loop_exit
      _
    %414 = vsyncpa [#allocation3], 1
    %s415 = scalar_lea.sflag [#allocation3], 1
    %416 = vsyncpa %s415, 1
    %417 = vsyncpa [#allocation6], 1
    %s418 = scalar_lea.sflag [#allocation6], 1
    %419 = vsyncpa %s418, 1
    %420 = vsyncpa [#allocation4], 1
    %s421 = scalar_lea.sflag [#allocation4], 1
    %422 = vsyncpa %s421, 1

</llo_original>
